<compile_context>
chip_gen: v6e
topology: v6e:2x2x1
jax: 0.10.0
libtpu: 0.0.40
codegen_flags: <defaults>
</compile_context>

<pallas_src>
import numpy as np
import jax
import jax.numpy as jnp
from jax.experimental import pallas as pl
from jax.experimental.pallas import tpu as pltpu

EMBED = 64
HEADS = 4
HEAD_DIM = EMBED // HEADS


def _mha_fusion_kernel(pos_ref, vel_ref, w_qkv_ref, b_qkv_ref, sel_d_ref,
                       m_bc_ref, c_bc_ref, w_out_ref, b_out_ref, out_ref):
    f32 = jnp.float32
    E = EMBED
    E2 = 2 * E

    # (bb, 128) tiles: row r = [feat(batch 2r) | feat(batch 2r+1)] (free wrapper reshape).
    pos2 = pos_ref[...].astype(f32)
    vel2 = vel_ref[...].astype(f32)
    bb = pos2.shape[0]

    # Assemble the per-batch-row 128-lane inputs x_e = [pos_even|vel_even],
    # x_o = [pos_odd|vel_odd] with one XLU half-rotate + select each (no HBM concat).
    lane = jax.lax.broadcasted_iota(jnp.int32, (bb, E2), 1)
    low = lane < E
    x_e = jnp.where(low, pos2, pltpu.roll(vel2, shift=E, axis=1))
    x_o = jnp.where(low, pltpu.roll(pos2, shift=E, axis=1), vel2)

    # Fused QKV projection with a single shared dense-K weight (128, 384).
    # Column layout (6 x 64): [ q_pos | q_vel | kdiff | kdiff | v_pos | v_vel ],
    # kdiff = (k_pos - k_vel) / sqrt(head_dim)   (scale + bias cancellation folded in).
    w_qkv = w_qkv_ref[...]
    b_qkv = b_qkv_ref[...]
    qkv_e = jnp.dot(x_e, w_qkv, preferred_element_type=f32) + b_qkv
    qkv_o = jnp.dot(x_o, w_qkv, preferred_element_type=f32) + b_qkv

    # Per-head score differences for BOTH batch rows via ONE K=256 selector matmul.
    prod = jnp.concatenate(
        [qkv_e[:, 0:E2] * qkv_e[:, E2:2 * E2],
         qkv_o[:, 0:E2] * qkv_o[:, E2:2 * E2]], axis=-1)                # (bb, 256)
    d = jnp.dot(prod, sel_d_ref[...], preferred_element_type=f32)        # (bb, 16)

    # Softmax over the 2 keys == sigmoid of the score difference (exact, no divide needed).
    a = jax.nn.sigmoid(d)                                                # [a_pp|a_vp] x {e,o}

    # Broadcast per-head attention weights back to the value lanes with ONE matmul;
    # w_v = 2 - w_p is handled by the -1 entries plus the constant row.
    bc = jnp.dot(a, m_bc_ref[...], preferred_element_type=f32) + c_bc_ref[...]   # (bb, 256)
    v_cat = jnp.concatenate([qkv_e[:, 2 * E2:3 * E2],
                             qkv_o[:, 2 * E2:3 * E2]], axis=-1)                   # (bb, 256)
    o = bc * v_cat

    # Fused out_proj + seq-mean(0.5) + fc (+ query-sum and the 64->128 lane fold), giving a
    # lane-dense paired output row [y_even | y_odd].
    y = jnp.dot(o, w_out_ref[...], preferred_element_type=f32) + b_out_ref[...]
    out_ref[...] = y.astype(out_ref.dtype)


def mha_fusion(branch_pos_output, branch_vel_output, kparams, *,
               block_rows=1024, stream_dtype=jnp.float32):
    """block_rows = paired rows per grid step (each paired row = 2 batch rows)."""
    E = EMBED
    B, e = branch_pos_output.shape
    assert e == E

    pos = branch_pos_output.astype(stream_dtype)
    vel = branch_vel_output.astype(stream_dtype)

    # Pad batch to even so two batch rows share one vreg row.
    Bp = B + (B % 2)
    if Bp != B:
        pos = jnp.pad(pos, ((0, Bp - B), (0, 0)))
        vel = jnp.pad(vel, ((0, Bp - B), (0, 0)))
    B2 = Bp // 2

    # Pair two consecutive batch rows per vreg row (free row-major reshape; no HBM concat).
    pos2 = pos.reshape(B2, 2 * E)
    vel2 = vel.reshape(B2, 2 * E)

    # Tile selection: big tiles amortize the ~0.35us/step pipeline overhead, but keep >= 2
    # tiles whenever the batch allows so v7x's two TensorCores both get work (neutral on
    # v5e / v6e which have a single TC).
    if B2 >= 16:
        two_tile_cap = (((B2 + 1) // 2) + 7) // 8 * 8
        br = min(block_rows, two_tile_cap)
    else:
        br = min(block_rows, B2)
    if br < B2 and br % 8 != 0:
        br = max(8, (br // 8) * 8)            # sublane-aligned tiles when tiled
    ntiles = -(-B2 // br)
    B2p = ntiles * br
    if B2p != B2:
        pad2 = ((0, B2p - B2), (0, 0))
        pos2 = jnp.pad(pos2, pad2)
        vel2 = jnp.pad(vel2, pad2)

    io_spec = pl.BlockSpec((br, 2 * E), lambda i: (i, 0))

    def const_spec(shape):
        # Constant block index -> weight/selector stays resident in VMEM across grid steps.
        return pl.BlockSpec(shape, lambda i: (0, 0))

    y2 = pl.pallas_call(
        _mha_fusion_kernel,
        out_shape=jax.ShapeDtypeStruct((B2p, 2 * E), stream_dtype),
        grid=(ntiles,),
        in_specs=[io_spec, io_spec,
                  const_spec((2 * E, 6 * E)),        # fused QKV weight (128, 384)
                  const_spec((1, 6 * E)),            # fused QKV bias
                  const_spec((4 * E, 4 * HEADS)),    # score-difference head selector (256, 16)
                  const_spec((4 * HEADS, 4 * E)),    # attention-weight broadcast (16, 256)
                  const_spec((1, 4 * E)),            # broadcast constant row
                  const_spec((4 * E, 2 * E)),        # fused out_proj+mean+fc weight (256, 128)
                  const_spec((1, 2 * E))],           # fused output bias
        out_specs=io_spec,
        compiler_params=pltpu.CompilerParams(dimension_semantics=("parallel",)),
    )(pos2, vel2, kparams["w_qkv"], kparams["b_qkv"], kparams["sel_d"],
      kparams["m_bc"], kparams["c_bc"], kparams["w_out"], kparams["b_out"])

    # Un-pair output rows (free reshape) and drop padding.
    return y2[:B2].reshape(Bp, E)[:B]


def init_params(key):
    """Deterministic synthetic params matching nn.MultiheadAttention + nn.Linear."""
    ks = jax.random.split(key, 6)
    E = EMBED
    scale = 1.0 / np.sqrt(E)
    return {
        "in_proj_w": jax.random.normal(ks[0], (3 * E, E), jnp.float32) * scale,
        "in_proj_b": jax.random.normal(ks[1], (3 * E,), jnp.float32) * 0.1,
        "out_proj_w": jax.random.normal(ks[2], (E, E), jnp.float32) * scale,
        "out_proj_b": jax.random.normal(ks[3], (E,), jnp.float32) * 0.1,
        "fc_w": jax.random.normal(ks[4], (E, E), jnp.float32) * scale,
        "fc_b": jax.random.normal(ks[5], (E,), jnp.float32) * 0.1,
    }


def pack_params(raw):
    """Host-side (numpy, f64) packing of the fused kernel parameters."""
    E, H, Dh = EMBED, HEADS, HEAD_DIM
    f64 = np.float64
    ipw = np.asarray(raw["in_proj_w"], f64)
    ipb = np.asarray(raw["in_proj_b"], f64)
    wo = np.asarray(raw["out_proj_w"], f64)
    bo = np.asarray(raw["out_proj_b"], f64)
    wfc = np.asarray(raw["fc_w"], f64)
    bfc = np.asarray(raw["fc_b"], f64)

    wq_t, wk_t, wv_t = ipw[:E].T, ipw[E:2 * E].T, ipw[2 * E:].T
    bq, bv = ipb[:E], ipb[2 * E:]
    inv = 1.0 / np.sqrt(Dh)

    # QKV weight for x = [pos | vel]; columns: [q_pos | q_vel | kdiff | kdiff | v_pos | v_vel].
    w_qkv = np.zeros((2 * E, 6 * E), f64)
    b_qkv = np.zeros((6 * E,), f64)
    w_qkv[:E, 0:E] = wq_t;                 b_qkv[0:E] = bq
    w_qkv[E:, E:2 * E] = wq_t;             b_qkv[E:2 * E] = bq
    w_qkv[:E, 2 * E:3 * E] = wk_t * inv    # kdiff = (k_pos - k_vel)/sqrt(Dh); k-bias cancels
    w_qkv[E:, 2 * E:3 * E] = -wk_t * inv
    w_qkv[:E, 3 * E:4 * E] = wk_t * inv
    w_qkv[E:, 3 * E:4 * E] = -wk_t * inv
    w_qkv[:E, 4 * E:5 * E] = wv_t;         b_qkv[4 * E:5 * E] = bv
    w_qkv[E:, 5 * E:6 * E] = wv_t;         b_qkv[5 * E:6 * E] = bv

    # Score-difference head selector (256, 16): block-diag over {even,odd} batch rows.
    lanes = np.arange(2 * E)
    sel8 = (lanes[:, None] // Dh == np.arange(2 * H)[None, :]).astype(f64)   # (128, 8)
    sel_d = np.zeros((4 * E, 4 * H), f64)
    sel_d[:2 * E, :2 * H] = sel8
    sel_d[2 * E:, 2 * H:] = sel8

    # Broadcast matrix (16, 256) + constant row: bc = [w_p over v_pos lanes | w_v over v_vel],
    # with w_p = a_pp + a_vp and w_v = 2 - w_p per head.
    m_half = np.zeros((2 * H, 2 * E), f64)
    for l in range(E):
        h = l // Dh
        m_half[h, l] = 1.0
        m_half[H + h, l] = 1.0
        m_half[h, E + l] = -1.0
        m_half[H + h, E + l] = -1.0
    m_bc = np.zeros((4 * H, 4 * E), f64)
    m_bc[:2 * H, :2 * E] = m_half
    m_bc[2 * H:, 2 * E:] = m_half
    c_half = np.concatenate([np.zeros(E), 2.0 * np.ones(E)])
    c_bc = np.concatenate([c_half, c_half])

    # Fused out_proj + seq-mean(0.5) + fc, with the query-sum / lane-fold as stacked blocks.
    wf = 0.5 * (wo.T @ wfc.T)
    bf = bo @ wfc.T + bfc
    w_out = np.zeros((4 * E, 2 * E), f64)
    w_out[0:E, :E] = wf
    w_out[E:2 * E, :E] = wf
    w_out[2 * E:3 * E, E:] = wf
    w_out[3 * E:, E:] = wf
    b_out = np.concatenate([bf, bf])

    f32 = jnp.float32
    return {
        "w_qkv": jnp.asarray(w_qkv, f32),
        "b_qkv": jnp.asarray(b_qkv.reshape(1, -1), f32),
        "sel_d": jnp.asarray(sel_d, f32),
        "m_bc": jnp.asarray(m_bc, f32),
        "c_bc": jnp.asarray(c_bc.reshape(1, -1), f32),
        "w_out": jnp.asarray(w_out, f32),
        "b_out": jnp.asarray(b_out.reshape(1, -1), f32),
    }


def reference(pos, vel, raw):
    """Pure-JAX reference mirroring torch.nn.MultiheadAttention + Linear (unfused)."""
    E = EMBED
    wq, wk, wv = raw["in_proj_w"][:E], raw["in_proj_w"][E:2 * E], raw["in_proj_w"][2 * E:]
    bq, bk, bv = raw["in_proj_b"][:E], raw["in_proj_b"][E:2 * E], raw["in_proj_b"][2 * E:]
    x = jnp.stack([pos, vel], axis=1)                  # (B, 2, E)
    B = x.shape[0]
    q = x @ wq.T + bq
    k = x @ wk.T + bk
    v = x @ wv.T + bv
    qh = q.reshape(B, 2, HEADS, HEAD_DIM).transpose(0, 2, 1, 3)
    kh = k.reshape(B, 2, HEADS, HEAD_DIM).transpose(0, 2, 1, 3)
    vh = v.reshape(B, 2, HEADS, HEAD_DIM).transpose(0, 2, 1, 3)
    s = jnp.einsum("bhqd,bhkd->bhqk", qh, kh) / np.sqrt(HEAD_DIM)
    a = jax.nn.softmax(s, axis=-1)
    o = jnp.einsum("bhqk,bhkd->bhqd", a, vh).transpose(0, 2, 1, 3).reshape(B, 2, EMBED)
    o = o @ raw["out_proj_w"].T + raw["out_proj_b"]
    mean = o.mean(axis=1)
    return mean @ raw["fc_w"].T + raw["fc_b"]


if __name__ == "__main__":
    key = jax.random.PRNGKey(0)
    k_pos, k_vel, k_par, k_pos2, k_vel2 = jax.random.split(key, 5)

    raw = init_params(k_par)
    kparams = pack_params(raw)

    # Small single-tile case.
    B = 8
    pos = jax.random.normal(k_pos, (B, EMBED), jnp.float32)
    vel = jax.random.normal(k_vel, (B, EMBED), jnp.float32)
    out = jax.block_until_ready(mha_fusion(pos, vel, kparams))
    ref = reference(pos, vel, raw)
    # Host-side f64 weight folding + fused f32 matmuls reassociate reductions vs the
    # unfused reference, hence the 1e-4-level tolerance.
    np.testing.assert_allclose(np.asarray(out), np.asarray(ref), rtol=1e-4, atol=2e-4)

    # Multi-tile case: exercises the grid split (>= 2 tiles for v7x megacore) and padding.
    B = 40
    pos = jax.random.normal(k_pos2, (B, EMBED), jnp.float32)
    vel = jax.random.normal(k_vel2, (B, EMBED), jnp.float32)
    out = jax.block_until_ready(mha_fusion(pos, vel, kparams))
    ref = reference(pos, vel, raw)
    np.testing.assert_allclose(np.asarray(out), np.asarray(ref), rtol=1e-4, atol=2e-4)

    print("KERNEL_OK")
</pallas_src>

<mosaic_0001>
module attributes {stable_mosaic.version = 11 : i64} {
  func.func @_mha_fusion_kernel(%arg0: i32, %arg1: memref<4x128xf32, #tpu.memory_space<vmem>>, %arg2: memref<4x128xf32, #tpu.memory_space<vmem>>, %arg3: memref<128x384xf32, #tpu.memory_space<vmem>>, %arg4: memref<1x384xf32, #tpu.memory_space<vmem>>, %arg5: memref<256x16xf32, #tpu.memory_space<vmem>>, %arg6: memref<16x256xf32, #tpu.memory_space<vmem>>, %arg7: memref<1x256xf32, #tpu.memory_space<vmem>>, %arg8: memref<256x128xf32, #tpu.memory_space<vmem>>, %arg9: memref<1x128xf32, #tpu.memory_space<vmem>>, %arg10: memref<4x128xf32, #tpu.memory_space<vmem>>) attributes {dimension_semantics = [#tpu.dimension_semantics<parallel>], iteration_bounds = array<i64: 1>, scalar_prefetch = 0 : i64, scratch_operands = 0 : i64, tpu.core_type = #tpu.core_type<tc>, window_params = [{transform_indices = @transform_0, window_bounds = array<i64: 4, 128>}, {transform_indices = @transform_1, window_bounds = array<i64: 4, 128>}, {pipeline_mode = #tpu.pipeline_mode<synchronous>, transform_indices = @transform_2, window_bounds = array<i64: 128, 384>}, {pipeline_mode = #tpu.pipeline_mode<synchronous>, transform_indices = @transform_3, window_bounds = array<i64: 1, 384>}, {pipeline_mode = #tpu.pipeline_mode<synchronous>, transform_indices = @transform_4, window_bounds = array<i64: 256, 16>}, {pipeline_mode = #tpu.pipeline_mode<synchronous>, transform_indices = @transform_5, window_bounds = array<i64: 16, 256>}, {pipeline_mode = #tpu.pipeline_mode<synchronous>, transform_indices = @transform_6, window_bounds = array<i64: 1, 256>}, {pipeline_mode = #tpu.pipeline_mode<synchronous>, transform_indices = @transform_7, window_bounds = array<i64: 256, 128>}, {pipeline_mode = #tpu.pipeline_mode<synchronous>, transform_indices = @transform_8, window_bounds = array<i64: 1, 128>}, {transform_indices = @transform_9, window_bounds = array<i64: 4, 128>}]} {
    %c0 = arith.constant 0 : index
    %c0_0 = arith.constant 0 : index
    %0 = vector.load %arg1[%c0, %c0_0] : memref<4x128xf32, #tpu.memory_space<vmem>>, vector<4x128xf32>
    %c0_1 = arith.constant 0 : index
    %c0_2 = arith.constant 0 : index
    %1 = vector.load %arg2[%c0_1, %c0_2] : memref<4x128xf32, #tpu.memory_space<vmem>>, vector<4x128xf32>
    %2 = tpu.iota {dimensions = array<i32: 1>} : vector<4x128xi32>
    %c64_i32 = arith.constant 64 : i32
    %3 = vector.broadcast %c64_i32 : i32 to vector<4x128xi32>
    %4 = arith.cmpi slt, %2, %3 : vector<4x128xi32>
    %c64_i32_3 = arith.constant 64 : i32
    %5 = tpu.dynamic_rotate %1 by %c64_i32_3 dim 1 : vector<4x128xf32>, i32 -> vector<4x128xf32>
    %6 = arith.select %4, %0, %5 : vector<4x128xi1>, vector<4x128xf32>
    %c64_i32_4 = arith.constant 64 : i32
    %7 = tpu.dynamic_rotate %0 by %c64_i32_4 dim 1 : vector<4x128xf32>, i32 -> vector<4x128xf32>
    %8 = arith.select %4, %7, %1 : vector<4x128xi1>, vector<4x128xf32>
    %c0_5 = arith.constant 0 : index
    %c0_6 = arith.constant 0 : index
    %9 = vector.load %arg3[%c0_5, %c0_6] : memref<128x384xf32, #tpu.memory_space<vmem>>, vector<128x384xf32>
    %c0_7 = arith.constant 0 : index
    %c0_8 = arith.constant 0 : index
    %10 = vector.load %arg4[%c0_7, %c0_8] : memref<1x384xf32, #tpu.memory_space<vmem>>, vector<1x384xf32>
    %cst = arith.constant dense<0.000000e+00> : vector<4x384xf32>
    %11 = tpu.matmul %6, %9, %cst {dimension_numbers = #tpu.dot_dimension_numbers<[1], [0], [0], [1], [0, 0, 1, 1], [], []>} : vector<4x128xf32>, vector<128x384xf32>, vector<4x384xf32> -> vector<4x384xf32>
    %12 = vector.broadcast %10 : vector<1x384xf32> to vector<4x384xf32>
    %13 = arith.addf %11, %12 : vector<4x384xf32>
    %cst_9 = arith.constant dense<0.000000e+00> : vector<4x384xf32>
    %14 = tpu.matmul %8, %9, %cst_9 {dimension_numbers = #tpu.dot_dimension_numbers<[1], [0], [0], [1], [0, 0, 1, 1], [], []>} : vector<4x128xf32>, vector<128x384xf32>, vector<4x384xf32> -> vector<4x384xf32>
    %15 = vector.broadcast %10 : vector<1x384xf32> to vector<4x384xf32>
    %16 = arith.addf %14, %15 : vector<4x384xf32>
    %17 = vector.extract_strided_slice %13 {offsets = [0, 0], sizes = [4, 128], strides = [1, 1]} : vector<4x384xf32> to vector<4x128xf32>
    %18 = vector.extract_strided_slice %13 {offsets = [0, 128], sizes = [4, 128], strides = [1, 1]} : vector<4x384xf32> to vector<4x128xf32>
    %19 = arith.mulf %17, %18 : vector<4x128xf32>
    %20 = vector.extract_strided_slice %16 {offsets = [0, 0], sizes = [4, 128], strides = [1, 1]} : vector<4x384xf32> to vector<4x128xf32>
    %21 = vector.extract_strided_slice %16 {offsets = [0, 128], sizes = [4, 128], strides = [1, 1]} : vector<4x384xf32> to vector<4x128xf32>
    %22 = arith.mulf %20, %21 : vector<4x128xf32>
    %23 = tpu.concatenate %19, %22 in 1 : vector<4x128xf32>, vector<4x128xf32> -> vector<4x256xf32>
    %c0_10 = arith.constant 0 : index
    %c0_11 = arith.constant 0 : index
    %24 = vector.load %arg5[%c0_10, %c0_11] : memref<256x16xf32, #tpu.memory_space<vmem>>, vector<256x16xf32>
    %cst_12 = arith.constant dense<0.000000e+00> : vector<4x16xf32>
    %25 = tpu.matmul %23, %24, %cst_12 {dimension_numbers = #tpu.dot_dimension_numbers<[1], [0], [0], [1], [0, 0, 1, 1], [], []>} : vector<4x256xf32>, vector<256x16xf32>, vector<4x16xf32> -> vector<4x16xf32>
    %26 = arith.negf %25 : vector<4x16xf32>
    %27 = math.exp %26 : vector<4x16xf32>
    %cst_13 = arith.constant 1.000000e+00 : f32
    %28 = vector.broadcast %cst_13 : f32 to vector<4x16xf32>
    %29 = arith.addf %28, %27 : vector<4x16xf32>
    %30 = arith.divf %28, %29 : vector<4x16xf32>
    %c0_14 = arith.constant 0 : index
    %c0_15 = arith.constant 0 : index
    %31 = vector.load %arg6[%c0_14, %c0_15] : memref<16x256xf32, #tpu.memory_space<vmem>>, vector<16x256xf32>
    %cst_16 = arith.constant dense<0.000000e+00> : vector<4x256xf32>
    %32 = tpu.matmul %30, %31, %cst_16 {dimension_numbers = #tpu.dot_dimension_numbers<[1], [0], [0], [1], [0, 0, 1, 1], [], []>} : vector<4x16xf32>, vector<16x256xf32>, vector<4x256xf32> -> vector<4x256xf32>
    %c0_17 = arith.constant 0 : index
    %c0_18 = arith.constant 0 : index
    %33 = vector.load %arg7[%c0_17, %c0_18] : memref<1x256xf32, #tpu.memory_space<vmem>>, vector<1x256xf32>
    %34 = vector.broadcast %33 : vector<1x256xf32> to vector<4x256xf32>
    %35 = arith.addf %32, %34 : vector<4x256xf32>
    %36 = vector.extract_strided_slice %13 {offsets = [0, 256], sizes = [4, 128], strides = [1, 1]} : vector<4x384xf32> to vector<4x128xf32>
    %37 = vector.extract_strided_slice %16 {offsets = [0, 256], sizes = [4, 128], strides = [1, 1]} : vector<4x384xf32> to vector<4x128xf32>
    %38 = tpu.concatenate %36, %37 in 1 : vector<4x128xf32>, vector<4x128xf32> -> vector<4x256xf32>
    %39 = arith.mulf %35, %38 : vector<4x256xf32>
    %c0_19 = arith.constant 0 : index
    %c0_20 = arith.constant 0 : index
    %40 = vector.load %arg8[%c0_19, %c0_20] : memref<256x128xf32, #tpu.memory_space<vmem>>, vector<256x128xf32>
    %cst_21 = arith.constant dense<0.000000e+00> : vector<4x128xf32>
    %41 = tpu.matmul %39, %40, %cst_21 {dimension_numbers = #tpu.dot_dimension_numbers<[1], [0], [0], [1], [0, 0, 1, 1], [], []>} : vector<4x256xf32>, vector<256x128xf32>, vector<4x128xf32> -> vector<4x128xf32>
    %c0_22 = arith.constant 0 : index
    %c0_23 = arith.constant 0 : index
    %42 = vector.load %arg9[%c0_22, %c0_23] : memref<1x128xf32, #tpu.memory_space<vmem>>, vector<1x128xf32>
    %43 = vector.broadcast %42 : vector<1x128xf32> to vector<4x128xf32>
    %44 = arith.addf %41, %43 : vector<4x128xf32>
    %c0_24 = arith.constant 0 : index
    %c0_25 = arith.constant 0 : index
    %45 = vector.load %arg10[%c0_24, %c0_25] : memref<4x128xf32, #tpu.memory_space<vmem>>, vector<4x128xf32>
    tpu.vector_store %arg10[%c0_24, %c0_25], %44 {strides = array<i32>} : memref<4x128xf32, #tpu.memory_space<vmem>>, vector<4x128xf32>,
    return
  }
  func.func @transform_0(%arg0: i32) -> (i32, i32) {
    %c0_i32 = arith.constant 0 : i32
    %c0_i32_0 = arith.constant 0 : i32
    return %arg0, %c0_i32 : i32, i32
  }
  func.func @transform_1(%arg0: i32) -> (i32, i32) {
    %c0_i32 = arith.constant 0 : i32
    %c0_i32_0 = arith.constant 0 : i32
    return %arg0, %c0_i32 : i32, i32
  }
  func.func @transform_2(%arg0: i32) -> (i32, i32) {
    %c0_i32 = arith.constant 0 : i32
    %c0_i32_0 = arith.constant 0 : i32
    %c0_i32_1 = arith.constant 0 : i32
    return %c0_i32, %c0_i32_0 : i32, i32
  }
  func.func @transform_3(%arg0: i32) -> (i32, i32) {
    %c0_i32 = arith.constant 0 : i32
    %c0_i32_0 = arith.constant 0 : i32
    %c0_i32_1 = arith.constant 0 : i32
    return %c0_i32, %c0_i32_0 : i32, i32
  }
  func.func @transform_4(%arg0: i32) -> (i32, i32) {
    %c0_i32 = arith.constant 0 : i32
    %c0_i32_0 = arith.constant 0 : i32
    %c0_i32_1 = arith.constant 0 : i32
    return %c0_i32, %c0_i32_0 : i32, i32
  }
  func.func @transform_5(%arg0: i32) -> (i32, i32) {
    %c0_i32 = arith.constant 0 : i32
    %c0_i32_0 = arith.constant 0 : i32
    %c0_i32_1 = arith.constant 0 : i32
    return %c0_i32, %c0_i32_0 : i32, i32
  }
  func.func @transform_6(%arg0: i32) -> (i32, i32) {
    %c0_i32 = arith.constant 0 : i32
    %c0_i32_0 = arith.constant 0 : i32
    %c0_i32_1 = arith.constant 0 : i32
    return %c0_i32, %c0_i32_0 : i32, i32
  }
  func.func @transform_7(%arg0: i32) -> (i32, i32) {
    %c0_i32 = arith.constant 0 : i32
    %c0_i32_0 = arith.constant 0 : i32
    %c0_i32_1 = arith.constant 0 : i32
    return %c0_i32, %c0_i32_0 : i32, i32
  }
  func.func @transform_8(%arg0: i32) -> (i32, i32) {
    %c0_i32 = arith.constant 0 : i32
    %c0_i32_0 = arith.constant 0 : i32
    %c0_i32_1 = arith.constant 0 : i32
    return %c0_i32, %c0_i32_0 : i32, i32
  }
  func.func @transform_9(%arg0: i32) -> (i32, i32) {
    %c0_i32 = arith.constant 0 : i32
    %c0_i32_0 = arith.constant 0 : i32
    return %arg0, %c0_i32 : i32, i32
  }
}

</mosaic_0001>

<llo_original>
// kernel: tpu_custom_call.1
$region0: #{tpu_custom_call.1}
  #allocation0 [shape = 'u32[]', space=smem, size = 0x4, offset = 0x4, fixed_abs, tag = 'smem constant byte address 0x4 - core index']
  #allocation1 [shape = 'u32[144,128]{1,0:T(1,128)}', space=vmem, size = 0x12000, scoped, tag = 'internal scratch']
  %s0 = inlined_call_operand.vmem [shape: f32[4,128], index: 0, kind: input, shape index: {}]
  %s1 = inlined_call_operand.vmem [shape: f32[4,128], index: 1, kind: input, shape index: {}]
  %s2 = inlined_call_operand.hbm [shape: f32[128,384], index: 2, kind: input, shape index: {}]
  %s3 = inlined_call_operand.vmem [shape: f32[1,384], index: 3, kind: input, shape index: {}]
  %s4 = inlined_call_operand.vmem [shape: f32[256,16], index: 4, kind: input, shape index: {}]
  %s5 = inlined_call_operand.vmem [shape: f32[16,256], index: 5, kind: input, shape index: {}]
  %s6 = inlined_call_operand.hbm [shape: f32[1,256], index: 6, kind: input, shape index: {}]
  %s7 = inlined_call_operand.vmem [shape: f32[256,128], index: 7, kind: input, shape index: {}]
  %s8 = inlined_call_operand.vmem [shape: f32[1,128], index: 8, kind: input, shape index: {}]
  %s9 = inlined_call_operand.hbm [shape: f32[4,128], index: 9, kind: output, shape index: {}]
  %s10 = sld [smem:[#allocation0]]
  $region54: #{tpu_custom_call.1} parent=0
    _
  %s12 = ssub.s32 1, %s10
  %s13 = scalar_select 0, %s12, %s10
  $region1: #{tpu_custom_call.1} parent=0
    #allocation2 [shape = 'u8[196608]{0}', space=vmem, size = 0x30000, scoped, tag = 'input window, operand 2, single buffered']
    #allocation3 [shape = 's32[1]{0}', space=sflag, size = 0x4, scoped, tag = 'scoped memory for tpu_custom_call.1']
    #allocation4 [shape = 's32[1]{0}', space=sflag, size = 0x4, scoped, tag = 'scoped memory for tpu_custom_call.1']
    #allocation5 [shape = 'u8[1024]{0}', space=vmem, size = 0x400, scoped, tag = 'input window, operand 6, single buffered']
    #allocation6 [shape = 's32[1]{0}', space=sflag, size = 0x4, scoped, tag = 'scoped memory for tpu_custom_call.1']
    #allocation7 [shape = 'u8[2048]{0}', space=vmem, size = 0x800, scoped, tag = 'output window, operand 0, single buffered']
    %14 = vsyncpa [#allocation3], 0
    %15 = vsyncpa [#allocation6], 0
    %16 = vsyncpa [#allocation4], 0
    // Predicated region
    $region2: #{tpu_custom_call.1} parent=1 // pred_check
      _
    $region3: #{tpu_custom_call.1} parent=1 // pred_check_branch
      %18 = sbr.rel (0) target = $region5
    $region4: #{tpu_custom_call.1} parent=1 // pred_region
      _
    $region5: #{tpu_custom_call.1} parent=1 // pred_fallthru
      _
    // Predicated region
    $region6: #{tpu_custom_call.1} parent=1 // pred_check
      _
    $region7: #{tpu_custom_call.1} parent=1 // pred_check_branch
      %20 = sbr.rel (0) target = $region9
    $region8: #{tpu_custom_call.1} parent=1 // pred_region
      _
    $region9: #{tpu_custom_call.1} parent=1 // pred_fallthru
      _
    // Predicated region
    $region10: #{tpu_custom_call.1} parent=1 // pred_check
      _
    $region11: #{tpu_custom_call.1} parent=1 // pred_check_branch
      %22 = sbr.rel (0) target = $region13
    $region12: #{tpu_custom_call.1} parent=1 // pred_region
      %s24 = ssub.s32 6144, 6144
      %25 = vsyncadd [#allocation3], %s24
      %s26 = sshll.u32 [#allocation2], 4
      %s27 = int_to_ptr.vmem [resolvable:$true] %s26
      %32 = dma.hbm_to_vmem [thread:$0]  %s2, 6144, %s27, [#allocation3], 384, 384, 24
    $region13: #{tpu_custom_call.1} parent=1 // pred_fallthru
      _
    // Predicated region
    $region14: #{tpu_custom_call.1} parent=1 // pred_check
      _
    $region15: #{tpu_custom_call.1} parent=1 // pred_check_branch
      %34 = sbr.rel (0) target = $region17
    $region16: #{tpu_custom_call.1} parent=1 // pred_region
      _
    $region17: #{tpu_custom_call.1} parent=1 // pred_fallthru
      _
    // Predicated region
    $region18: #{tpu_custom_call.1} parent=1 // pred_check
      _
    $region19: #{tpu_custom_call.1} parent=1 // pred_check_branch
      %36 = sbr.rel (0) target = $region21
    $region20: #{tpu_custom_call.1} parent=1 // pred_region
      _
    $region21: #{tpu_custom_call.1} parent=1 // pred_fallthru
      _
    // Predicated region
    $region22: #{tpu_custom_call.1} parent=1 // pred_check
      _
    $region23: #{tpu_custom_call.1} parent=1 // pred_check_branch
      %38 = sbr.rel (0) target = $region25
    $region24: #{tpu_custom_call.1} parent=1 // pred_region
      _
    $region25: #{tpu_custom_call.1} parent=1 // pred_fallthru
      _
    // Predicated region
    $region26: #{tpu_custom_call.1} parent=1 // pred_check
      _
    $region27: #{tpu_custom_call.1} parent=1 // pred_check_branch
      %40 = sbr.rel (0) target = $region29
    $region28: #{tpu_custom_call.1} parent=1 // pred_region
      %s42 = ssub.s32 32, 32
      %43 = vsyncadd [#allocation6], %s42
      %s45 = sshll.u32 [#allocation5], 4
      %s46 = int_to_ptr.vmem [resolvable:$true] %s45
      %48 = dma.hbm_to_vmem [thread:$0]  %s6, 32, %s46, [#allocation6]
    $region29: #{tpu_custom_call.1} parent=1 // pred_fallthru
      _
    // Predicated region
    $region30: #{tpu_custom_call.1} parent=1 // pred_check
      _
    $region31: #{tpu_custom_call.1} parent=1 // pred_check_branch
      %50 = sbr.rel (0) target = $region33
    $region32: #{tpu_custom_call.1} parent=1 // pred_region
      _
    $region33: #{tpu_custom_call.1} parent=1 // pred_fallthru
      _
    // Predicated region
    $region34: #{tpu_custom_call.1} parent=1 // pred_check
      _
    $region35: #{tpu_custom_call.1} parent=1 // pred_check_branch
      %52 = sbr.rel (0) target = $region37
    $region36: #{tpu_custom_call.1} parent=1 // pred_region
      _
    $region37: #{tpu_custom_call.1} parent=1 // pred_fallthru
      _
    // Predicated region
    $region38: #{tpu_custom_call.1} parent=1 // pred_check
      _
    $region39: #{tpu_custom_call.1} parent=1 // pred_check_branch
      %54 = sbr.rel (0) target = $region41
    $region40: #{tpu_custom_call.1} parent=1 // pred_region
      %55 = dma.done [#allocation3], 6144
    $region41: #{tpu_custom_call.1} parent=1 // pred_fallthru
      _
    // Predicated region
    $region42: #{tpu_custom_call.1} parent=1 // pred_check
      _
    $region43: #{tpu_custom_call.1} parent=1 // pred_check_branch
      %57 = sbr.rel (0) target = $region45
    $region44: #{tpu_custom_call.1} parent=1 // pred_region
      %58 = dma.done [#allocation6], 32
    $region45: #{tpu_custom_call.1} parent=1 // pred_fallthru
      _
    %v59 = vld [vmem:[%s0] sm:$0xf]
    %v60 = vld [vmem:[%s1] sm:$0xf]
    %v61 = vlaneseq
    %v62 = vand.u32 %v61, 127
    %vm63 = vcmp.lt.s32.totalorder %v62, 64
    %64 = vrot.lane.b32.xlu0 %v60, 64
    %v65 = vpop.permute.xlu0 %64
    %v66 = vsel %vm63, %v59, %v65
    %67 = vrot.lane.b32.xlu0 %v59, 64
    %v68 = vpop.permute.xlu0 %67
    %v69 = vsel %vm63, %v68, %v60
    %v70 = vld [vmem:[#allocation2] sm:$0xff]
    %v71 = vld [vmem:[#allocation2 + $0x8] sm:$0xff]
    %v72 = vld [vmem:[#allocation2 + $0x10] sm:$0xff]
    %v73 = vld [vmem:[#allocation2 + $0x18] sm:$0xff]
    %v74 = vld [vmem:[#allocation2 + $0x20] sm:$0xff]
    %v75 = vld [vmem:[#allocation2 + $0x28] sm:$0xff]
    %v76 = vld [vmem:[#allocation2 + $0x30] sm:$0xff]
    %v77 = vld [vmem:[#allocation2 + $0x38] sm:$0xff]
    %v78 = vld [vmem:[#allocation2 + $0x40] sm:$0xff]
    %v79 = vld [vmem:[#allocation2 + $0x48] sm:$0xff]
    %v80 = vld [vmem:[#allocation2 + $0x50] sm:$0xff]
    %v81 = vld [vmem:[#allocation2 + $0x58] sm:$0xff]
    %v82 = vld [vmem:[#allocation2 + $0x60] sm:$0xff]
    %v83 = vld [vmem:[#allocation2 + $0x68] sm:$0xff]
    %v84 = vld [vmem:[#allocation2 + $0x70] sm:$0xff]
    %v85 = vld [vmem:[#allocation2 + $0x78] sm:$0xff]
    %v86 = vld [vmem:[#allocation2 + $0x80] sm:$0xff]
    %v87 = vld [vmem:[#allocation2 + $0x88] sm:$0xff]
    %v88 = vld [vmem:[#allocation2 + $0x90] sm:$0xff]
    %v89 = vld [vmem:[#allocation2 + $0x98] sm:$0xff]
    %v90 = vld [vmem:[#allocation2 + $0xa0] sm:$0xff]
    %v91 = vld [vmem:[#allocation2 + $0xa8] sm:$0xff]
    %v92 = vld [vmem:[#allocation2 + $0xb0] sm:$0xff]
    %v93 = vld [vmem:[#allocation2 + $0xb8] sm:$0xff]
    %v94 = vld [vmem:[#allocation2 + $0xc0] sm:$0xff]
    %v95 = vld [vmem:[#allocation2 + $0xc8] sm:$0xff]
    %v96 = vld [vmem:[#allocation2 + $0xd0] sm:$0xff]
    %v97 = vld [vmem:[#allocation2 + $0xd8] sm:$0xff]
    %v98 = vld [vmem:[#allocation2 + $0xe0] sm:$0xff]
    %v99 = vld [vmem:[#allocation2 + $0xe8] sm:$0xff]
    %v100 = vld [vmem:[#allocation2 + $0xf0] sm:$0xff]
    %v101 = vld [vmem:[#allocation2 + $0xf8] sm:$0xff]
    %v102 = vld [vmem:[#allocation2 + $0x100] sm:$0xff]
    %v103 = vld [vmem:[#allocation2 + $0x108] sm:$0xff]
    %v104 = vld [vmem:[#allocation2 + $0x110] sm:$0xff]
    %v105 = vld [vmem:[#allocation2 + $0x118] sm:$0xff]
    %v106 = vld [vmem:[#allocation2 + $0x120] sm:$0xff]
    %v107 = vld [vmem:[#allocation2 + $0x128] sm:$0xff]
    %v108 = vld [vmem:[#allocation2 + $0x130] sm:$0xff]
    %v109 = vld [vmem:[#allocation2 + $0x138] sm:$0xff]
    %v110 = vld [vmem:[#allocation2 + $0x140] sm:$0xff]
    %v111 = vld [vmem:[#allocation2 + $0x148] sm:$0xff]
    %v112 = vld [vmem:[#allocation2 + $0x150] sm:$0xff]
    %v113 = vld [vmem:[#allocation2 + $0x158] sm:$0xff]
    %v114 = vld [vmem:[#allocation2 + $0x160] sm:$0xff]
    %v115 = vld [vmem:[#allocation2 + $0x168] sm:$0xff]
    %v116 = vld [vmem:[#allocation2 + $0x170] sm:$0xff]
    %v117 = vld [vmem:[#allocation2 + $0x178] sm:$0xff]
    %v118 = vld [vmem:[%s3] sm:$0x7]
    %v120 = vlaneseq
    %v121 = vshrl.u32 %v120, 7
    %v122 = vsub.s32 0, %v121
    %v123 = vrot.slane %v118, %v122
    %v124 = vlaneseq
    %v125 = vshrl.u32 %v124, 7
    %v126 = vsub.s32 1, %v125
    %v127 = vrot.slane %v118, %v126
    %v128 = vlaneseq
    %v129 = vshrl.u32 %v128, 7
    %v130 = vsub.s32 2, %v129
    %v131 = vrot.slane %v118, %v130
    %135 = vmatprep.subr.mxu0 %v116
    %136 = vmatpush1.msra.mxu0 %v115
    %137 = vmatprep.subr.mxu0 %v113
    %138 = vmatpush1.msra.mxu0 %v112
    %139 = vmatprep.subr.mxu0 %v110
    %140 = vmatpush1.msra.mxu0 %v109
    %141 = vmatprep.subr.mxu0 %v107
    %142 = vmatpush1.msra.mxu0 %v106
    %143 = vmatprep.subr.mxu0 %v104
    %144 = vmatpush1.msra.mxu0 %v103
    %145 = vmatprep.subr.mxu0 %v101
    %146 = vmatpush1.msra.mxu0 %v100
    %147 = vmatprep.subr.mxu0 %v98
    %148 = vmatpush1.msra.mxu0 %v97
    %149 = vmatprep.subr.mxu0 %v95
    %150 = vmatpush1.msra.mxu0 %v94
    %151 = vmatprep.subr.mxu0 %v92
    %152 = vmatpush1.msra.mxu0 %v91
    %153 = vmatprep.subr.mxu0 %v89
    %154 = vmatpush1.msra.mxu0 %v88
    %155 = vmatprep.subr.mxu0 %v86
    %156 = vmatpush1.msra.mxu0 %v85
    %157 = vmatprep.subr.mxu0 %v83
    %158 = vmatpush1.msra.mxu0 %v82
    %159 = vmatprep.subr.mxu0 %v80
    %160 = vmatpush1.msra.mxu0 %v79
    %161 = vmatprep.subr.mxu0 %v77
    %162 = vmatpush1.msra.mxu0 %v76
    %163 = vmatprep.subr.mxu0 %v74
    %164 = vmatpush1.msra.mxu0 %v73
    %165 = vmatprep.subr.mxu0 %v71
    %166 = vmatpush1.msra.mxu0 %v70
    %167 = vmatprep.subr.mxu0 0.0
    %168 = vmatpush2.msra.mxu0 0.0
    %169 = vmatprep.subr.mxu0 0.0
    %170 = vmatpush2.msra.mxu0 0.0
    %171 = vmatprep.subr.mxu0 0.0
    %172 = vmatpush2.msra.mxu0 0.0
    %173 = vmatprep.subr.mxu0 0.0
    %174 = vmatpush2.msra.mxu0 0.0
    %175 = vmatprep.subr.mxu0 0.0
    %176 = vmatpush2.msra.mxu0 0.0
    %177 = vmatprep.subr.mxu0 0.0
    %178 = vmatpush2.msra.mxu0 0.0
    %179 = vmatprep.subr.mxu0 0.0
    %180 = vmatpush2.msra.mxu0 0.0
    %181 = vmatprep.subr.mxu0 0.0
    %182 = vmatpush2.msra.mxu0 0.0
    %183 = vmatprep.subr.mxu0 0.0
    %184 = vmatpush2.msra.mxu0 0.0
    %185 = vmatprep.subr.mxu0 0.0
    %186 = vmatpush2.msra.mxu0 0.0
    %187 = vmatprep.subr.mxu0 0.0
    %188 = vmatpush2.msra.mxu0 0.0
    %189 = vmatprep.subr.mxu0 0.0
    %190 = vmatpush2.msra.mxu0 0.0
    %191 = vmatprep.subr.mxu0 0.0
    %192 = vmatpush2.msra.mxu0 0.0
    %193 = vmatprep.subr.mxu0 0.0
    %194 = vmatpush2.msra.mxu0 0.0
    %195 = vmatprep.subr.mxu0 0.0
    %196 = vmatpush2.msra.mxu0 0.0
    %197 = vmatprep.subr.mxu0 0.0
    %198 = vmatpush2.msra.mxu0 0.0
    %199 = vmatprep.mubr.f32.mxu0 0.0
    %200 = vmatmul.mubr.f32.gmra.mxu0 %v66
    %v201 = vpop.f32.mrf.mxu0
    %v202 = vadd.f32 %v123, %v201
    %v203 = vpop.f32.mrf.mxu0
    %v204 = vadd.f32 %v127, %v203
    %205 = vdwg.mxu0
    %206 = vmatprep.subr.mxu0 0.0
    %207 = vmatpush1.msra.mxu0 %v117
    %208 = vmatprep.subr.mxu0 0.0
    %209 = vmatpush1.msra.mxu0 %v114
    %210 = vmatprep.subr.mxu0 0.0
    %211 = vmatpush1.msra.mxu0 %v111
    %212 = vmatprep.subr.mxu0 0.0
    %213 = vmatpush1.msra.mxu0 %v108
    %214 = vmatprep.subr.mxu0 0.0
    %215 = vmatpush1.msra.mxu0 %v105
    %216 = vmatprep.subr.mxu0 0.0
    %217 = vmatpush1.msra.mxu0 %v102
    %218 = vmatprep.subr.mxu0 0.0
    %219 = vmatpush1.msra.mxu0 %v99
    %220 = vmatprep.subr.mxu0 0.0
    %221 = vmatpush1.msra.mxu0 %v96
    %222 = vmatprep.subr.mxu0 0.0
    %223 = vmatpush1.msra.mxu0 %v93
    %224 = vmatprep.subr.mxu0 0.0
    %225 = vmatpush1.msra.mxu0 %v90
    %226 = vmatprep.subr.mxu0 0.0
    %227 = vmatpush1.msra.mxu0 %v87
    %228 = vmatprep.subr.mxu0 0.0
    %229 = vmatpush1.msra.mxu0 %v84
    %230 = vmatprep.subr.mxu0 0.0
    %231 = vmatpush1.msra.mxu0 %v81
    %232 = vmatprep.subr.mxu0 0.0
    %233 = vmatpush1.msra.mxu0 %v78
    %234 = vmatprep.subr.mxu0 0.0
    %235 = vmatpush1.msra.mxu0 %v75
    %236 = vmatprep.subr.mxu0 0.0
    %237 = vmatpush1.msra.mxu0 %v72
    %238 = vmatprep.subr.mxu0 0.0
    %239 = vmatpush2.msra.mxu0 0.0
    %240 = vmatprep.subr.mxu0 0.0
    %241 = vmatpush2.msra.mxu0 0.0
    %242 = vmatprep.subr.mxu0 0.0
    %243 = vmatpush2.msra.mxu0 0.0
    %244 = vmatprep.subr.mxu0 0.0
    %245 = vmatpush2.msra.mxu0 0.0
    %246 = vmatprep.subr.mxu0 0.0
    %247 = vmatpush2.msra.mxu0 0.0
    %248 = vmatprep.subr.mxu0 0.0
    %249 = vmatpush2.msra.mxu0 0.0
    %250 = vmatprep.subr.mxu0 0.0
    %251 = vmatpush2.msra.mxu0 0.0
    %252 = vmatprep.subr.mxu0 0.0
    %253 = vmatpush2.msra.mxu0 0.0
    %254 = vmatprep.subr.mxu0 0.0
    %255 = vmatpush2.msra.mxu0 0.0
    %256 = vmatprep.subr.mxu0 0.0
    %257 = vmatpush2.msra.mxu0 0.0
    %258 = vmatprep.subr.mxu0 0.0
    %259 = vmatpush2.msra.mxu0 0.0
    %260 = vmatprep.subr.mxu0 0.0
    %261 = vmatpush2.msra.mxu0 0.0
    %262 = vmatprep.subr.mxu0 0.0
    %263 = vmatpush2.msra.mxu0 0.0
    %264 = vmatprep.subr.mxu0 0.0
    %265 = vmatpush2.msra.mxu0 0.0
    %266 = vmatprep.subr.mxu0 0.0
    %267 = vmatpush2.msra.mxu0 0.0
    %268 = vmatprep.subr.mxu0 0.0
    %269 = vmatpush2.msra.mxu0 0.0
    %270 = vmatprep.mubr.f32.mxu0 0.0
    %271 = vmatmul.mubr.f32.gmra.mxu0 %v66
    %v272 = vpop.f32.mrf.mxu0
    %v273 = vadd.f32 %v131, %v272
    %v274 = vpop.f32.mrf.mxu0
    %275 = vdwg.mxu0
    %276 = vmatprep.subr.mxu0 %v116
    %277 = vmatpush1.msra.mxu0 %v115
    %278 = vmatprep.subr.mxu0 %v113
    %279 = vmatpush1.msra.mxu0 %v112
    %280 = vmatprep.subr.mxu0 %v110
    %281 = vmatpush1.msra.mxu0 %v109
    %282 = vmatprep.subr.mxu0 %v107
    %283 = vmatpush1.msra.mxu0 %v106
    %284 = vmatprep.subr.mxu0 %v104
    %285 = vmatpush1.msra.mxu0 %v103
    %286 = vmatprep.subr.mxu0 %v101
    %287 = vmatpush1.msra.mxu0 %v100
    %288 = vmatprep.subr.mxu0 %v98
    %289 = vmatpush1.msra.mxu0 %v97
    %290 = vmatprep.subr.mxu0 %v95
    %291 = vmatpush1.msra.mxu0 %v94
    %292 = vmatprep.subr.mxu0 %v92
    %293 = vmatpush1.msra.mxu0 %v91
    %294 = vmatprep.subr.mxu0 %v89
    %295 = vmatpush1.msra.mxu0 %v88
    %296 = vmatprep.subr.mxu0 %v86
    %297 = vmatpush1.msra.mxu0 %v85
    %298 = vmatprep.subr.mxu0 %v83
    %299 = vmatpush1.msra.mxu0 %v82
    %300 = vmatprep.subr.mxu0 %v80
    %301 = vmatpush1.msra.mxu0 %v79
    %302 = vmatprep.subr.mxu0 %v77
    %303 = vmatpush1.msra.mxu0 %v76
    %304 = vmatprep.subr.mxu0 %v74
    %305 = vmatpush1.msra.mxu0 %v73
    %306 = vmatprep.subr.mxu0 %v71
    %307 = vmatpush1.msra.mxu0 %v70
    %308 = vmatprep.subr.mxu0 0.0
    %309 = vmatpush2.msra.mxu0 0.0
    %310 = vmatprep.subr.mxu0 0.0
    %311 = vmatpush2.msra.mxu0 0.0
    %312 = vmatprep.subr.mxu0 0.0
    %313 = vmatpush2.msra.mxu0 0.0
    %314 = vmatprep.subr.mxu0 0.0
    %315 = vmatpush2.msra.mxu0 0.0
    %316 = vmatprep.subr.mxu0 0.0
    %317 = vmatpush2.msra.mxu0 0.0
    %318 = vmatprep.subr.mxu0 0.0
    %319 = vmatpush2.msra.mxu0 0.0
    %320 = vmatprep.subr.mxu0 0.0
    %321 = vmatpush2.msra.mxu0 0.0
    %322 = vmatprep.subr.mxu0 0.0
    %323 = vmatpush2.msra.mxu0 0.0
    %324 = vmatprep.subr.mxu0 0.0
    %325 = vmatpush2.msra.mxu0 0.0
    %326 = vmatprep.subr.mxu0 0.0
    %327 = vmatpush2.msra.mxu0 0.0
    %328 = vmatprep.subr.mxu0 0.0
    %329 = vmatpush2.msra.mxu0 0.0
    %330 = vmatprep.subr.mxu0 0.0
    %331 = vmatpush2.msra.mxu0 0.0
    %332 = vmatprep.subr.mxu0 0.0
    %333 = vmatpush2.msra.mxu0 0.0
    %334 = vmatprep.subr.mxu0 0.0
    %335 = vmatpush2.msra.mxu0 0.0
    %336 = vmatprep.subr.mxu0 0.0
    %337 = vmatpush2.msra.mxu0 0.0
    %338 = vmatprep.subr.mxu0 0.0
    %339 = vmatpush2.msra.mxu0 0.0
    %340 = vmatprep.mubr.f32.mxu0 0.0
    %341 = vmatmul.mubr.f32.gmra.mxu0 %v69
    %v342 = vpop.f32.mrf.mxu0
    %v343 = vadd.f32 %v123, %v342
    %v344 = vpop.f32.mrf.mxu0
    %v345 = vadd.f32 %v127, %v344
    %346 = vdwg.mxu0
    %347 = vmatprep.subr.mxu0 0.0
    %348 = vmatpush1.msra.mxu0 %v117
    %349 = vmatprep.subr.mxu0 0.0
    %350 = vmatpush1.msra.mxu0 %v114
    %351 = vmatprep.subr.mxu0 0.0
    %352 = vmatpush1.msra.mxu0 %v111
    %353 = vmatprep.subr.mxu0 0.0
    %354 = vmatpush1.msra.mxu0 %v108
    %355 = vmatprep.subr.mxu0 0.0
    %356 = vmatpush1.msra.mxu0 %v105
    %357 = vmatprep.subr.mxu0 0.0
    %358 = vmatpush1.msra.mxu0 %v102
    %359 = vmatprep.subr.mxu0 0.0
    %360 = vmatpush1.msra.mxu0 %v99
    %361 = vmatprep.subr.mxu0 0.0
    %362 = vmatpush1.msra.mxu0 %v96
    %363 = vmatprep.subr.mxu0 0.0
    %364 = vmatpush1.msra.mxu0 %v93
    %365 = vmatprep.subr.mxu0 0.0
    %366 = vmatpush1.msra.mxu0 %v90
    %367 = vmatprep.subr.mxu0 0.0
    %368 = vmatpush1.msra.mxu0 %v87
    %369 = vmatprep.subr.mxu0 0.0
    %370 = vmatpush1.msra.mxu0 %v84
    %371 = vmatprep.subr.mxu0 0.0
    %372 = vmatpush1.msra.mxu0 %v81
    %373 = vmatprep.subr.mxu0 0.0
    %374 = vmatpush1.msra.mxu0 %v78
    %375 = vmatprep.subr.mxu0 0.0
    %376 = vmatpush1.msra.mxu0 %v75
    %377 = vmatprep.subr.mxu0 0.0
    %378 = vmatpush1.msra.mxu0 %v72
    %379 = vmatprep.subr.mxu0 0.0
    %380 = vmatpush2.msra.mxu0 0.0
    %381 = vmatprep.subr.mxu0 0.0
    %382 = vmatpush2.msra.mxu0 0.0
    %383 = vmatprep.subr.mxu0 0.0
    %384 = vmatpush2.msra.mxu0 0.0
    %385 = vmatprep.subr.mxu0 0.0
    %386 = vmatpush2.msra.mxu0 0.0
    %387 = vmatprep.subr.mxu0 0.0
    %388 = vmatpush2.msra.mxu0 0.0
    %389 = vmatprep.subr.mxu0 0.0
    %390 = vmatpush2.msra.mxu0 0.0
    %391 = vmatprep.subr.mxu0 0.0
    %392 = vmatpush2.msra.mxu0 0.0
    %393 = vmatprep.subr.mxu0 0.0
    %394 = vmatpush2.msra.mxu0 0.0
    %395 = vmatprep.subr.mxu0 0.0
    %396 = vmatpush2.msra.mxu0 0.0
    %397 = vmatprep.subr.mxu0 0.0
    %398 = vmatpush2.msra.mxu0 0.0
    %399 = vmatprep.subr.mxu0 0.0
    %400 = vmatpush2.msra.mxu0 0.0
    %401 = vmatprep.subr.mxu0 0.0
    %402 = vmatpush2.msra.mxu0 0.0
    %403 = vmatprep.subr.mxu0 0.0
    %404 = vmatpush2.msra.mxu0 0.0
    %405 = vmatprep.subr.mxu0 0.0
    %406 = vmatpush2.msra.mxu0 0.0
    %407 = vmatprep.subr.mxu0 0.0
    %408 = vmatpush2.msra.mxu0 0.0
    %409 = vmatprep.subr.mxu0 0.0
    %410 = vmatpush2.msra.mxu0 0.0
    %411 = vmatprep.mubr.f32.mxu0 0.0
    %412 = vmatmul.mubr.f32.gmra.mxu0 %v69
    %v413 = vpop.f32.mrf.mxu0
    %v414 = vadd.f32 %v131, %v413
    %v415 = vpop.f32.mrf.mxu0
    %416 = vdwg.mxu0
    %v417 = vmul.f32 %v202, %v204
    %v418 = vmul.f32 %v343, %v345
    %v419 = vld [vmem:[%s4] sm:$0xff]
    %v420 = vld [vmem:[%s4 + $0x8] sm:$0xff]
    %v421 = vld [vmem:[%s4 + $0x10] sm:$0xff]
    %v422 = vld [vmem:[%s4 + $0x18] sm:$0xff]
    %v423 = vld [vmem:[%s4 + $0x20] sm:$0xff]
    %v424 = vld [vmem:[%s4 + $0x28] sm:$0xff]
    %v425 = vld [vmem:[%s4 + $0x30] sm:$0xff]
    %v426 = vld [vmem:[%s4 + $0x38] sm:$0xff]
    %v427 = vld [vmem:[%s4 + $0x40] sm:$0xff]
    %v428 = vld [vmem:[%s4 + $0x48] sm:$0xff]
    %v429 = vld [vmem:[%s4 + $0x50] sm:$0xff]
    %v430 = vld [vmem:[%s4 + $0x58] sm:$0xff]
    %v431 = vld [vmem:[%s4 + $0x60] sm:$0xff]
    %v432 = vld [vmem:[%s4 + $0x68] sm:$0xff]
    %v433 = vld [vmem:[%s4 + $0x70] sm:$0xff]
    %v434 = vld [vmem:[%s4 + $0x78] sm:$0xff]
    %v435 = vld [vmem:[%s4 + $0x80] sm:$0xff]
    %v436 = vld [vmem:[%s4 + $0x88] sm:$0xff]
    %v437 = vld [vmem:[%s4 + $0x90] sm:$0xff]
    %v438 = vld [vmem:[%s4 + $0x98] sm:$0xff]
    %v439 = vld [vmem:[%s4 + $0xa0] sm:$0xff]
    %v440 = vld [vmem:[%s4 + $0xa8] sm:$0xff]
    %v441 = vld [vmem:[%s4 + $0xb0] sm:$0xff]
    %v442 = vld [vmem:[%s4 + $0xb8] sm:$0xff]
    %v443 = vld [vmem:[%s4 + $0xc0] sm:$0xff]
    %v444 = vld [vmem:[%s4 + $0xc8] sm:$0xff]
    %v445 = vld [vmem:[%s4 + $0xd0] sm:$0xff]
    %v446 = vld [vmem:[%s4 + $0xd8] sm:$0xff]
    %v447 = vld [vmem:[%s4 + $0xe0] sm:$0xff]
    %v448 = vld [vmem:[%s4 + $0xe8] sm:$0xff]
    %v449 = vld [vmem:[%s4 + $0xf0] sm:$0xff]
    %v450 = vld [vmem:[%s4 + $0xf8] sm:$0xff]
    %451 = vmatprep.subr.mxu0 0.0
    %452 = vmatpush1.msra.mxu0 %v434
    %453 = vmatprep.subr.mxu0 0.0
    %454 = vmatpush1.msra.mxu0 %v433
    %455 = vmatprep.subr.mxu0 0.0
    %456 = vmatpush1.msra.mxu0 %v432
    %457 = vmatprep.subr.mxu0 0.0
    %458 = vmatpush1.msra.mxu0 %v431
    %459 = vmatprep.subr.mxu0 0.0
    %460 = vmatpush1.msra.mxu0 %v430
    %461 = vmatprep.subr.mxu0 0.0
    %462 = vmatpush1.msra.mxu0 %v429
    %463 = vmatprep.subr.mxu0 0.0
    %464 = vmatpush1.msra.mxu0 %v428
    %465 = vmatprep.subr.mxu0 0.0
    %466 = vmatpush1.msra.mxu0 %v427
    %467 = vmatprep.subr.mxu0 0.0
    %468 = vmatpush1.msra.mxu0 %v426
    %469 = vmatprep.subr.mxu0 0.0
    %470 = vmatpush1.msra.mxu0 %v425
    %471 = vmatprep.subr.mxu0 0.0
    %472 = vmatpush1.msra.mxu0 %v424
    %473 = vmatprep.subr.mxu0 0.0
    %474 = vmatpush1.msra.mxu0 %v423
    %475 = vmatprep.subr.mxu0 0.0
    %476 = vmatpush1.msra.mxu0 %v422
    %477 = vmatprep.subr.mxu0 0.0
    %478 = vmatpush1.msra.mxu0 %v421
    %479 = vmatprep.subr.mxu0 0.0
    %480 = vmatpush1.msra.mxu0 %v420
    %481 = vmatprep.subr.mxu0 0.0
    %482 = vmatpush1.msra.mxu0 %v419
    %483 = vmatprep.subr.mxu0 0.0
    %484 = vmatpush2.msra.mxu0 %v450
    %485 = vmatprep.subr.mxu0 0.0
    %486 = vmatpush2.msra.mxu0 %v449
    %487 = vmatprep.subr.mxu0 0.0
    %488 = vmatpush2.msra.mxu0 %v448
    %489 = vmatprep.subr.mxu0 0.0
    %490 = vmatpush2.msra.mxu0 %v447
    %491 = vmatprep.subr.mxu0 0.0
    %492 = vmatpush2.msra.mxu0 %v446
    %493 = vmatprep.subr.mxu0 0.0
    %494 = vmatpush2.msra.mxu0 %v445
    %495 = vmatprep.subr.mxu0 0.0
    %496 = vmatpush2.msra.mxu0 %v444
    %497 = vmatprep.subr.mxu0 0.0
    %498 = vmatpush2.msra.mxu0 %v443
    %499 = vmatprep.subr.mxu0 0.0
    %500 = vmatpush2.msra.mxu0 %v442
    %501 = vmatprep.subr.mxu0 0.0
    %502 = vmatpush2.msra.mxu0 %v441
    %503 = vmatprep.subr.mxu0 0.0
    %504 = vmatpush2.msra.mxu0 %v440
    %505 = vmatprep.subr.mxu0 0.0
    %506 = vmatpush2.msra.mxu0 %v439
    %507 = vmatprep.subr.mxu0 0.0
    %508 = vmatpush2.msra.mxu0 %v438
    %509 = vmatprep.subr.mxu0 0.0
    %510 = vmatpush2.msra.mxu0 %v437
    %511 = vmatprep.subr.mxu0 0.0
    %512 = vmatpush2.msra.mxu0 %v436
    %513 = vmatprep.subr.mxu0 0.0
    %514 = vmatpush2.msra.mxu0 %v435
    %515 = vmatprep.mubr.f32.mxu0 %v418
    %516 = vmatmul.mubr.f32.gmra.mxu0 %v417
    %v517 = vpop.f32.mrf.mxu0
    %v518 = vadd.f32 0.0, %v517
    %v519 = vpop.f32.mrf.mxu0
    %520 = vdwg.mxu0
    %v521 = vxor.u32 %v518, 2147483648
    %v522 = vmul.f32 %v521, 1.442695
    %v523 = vpow.pop %v522
    %v524 = vadd.f32 %v523, 1.0
    %v525 = vrcp.pop %v524
    %v526 = vmul.f32 1.0, %v525
    %v527 = vld [vmem:[%s5] sm:$0xff]
    %v528 = vld [vmem:[%s5 + $0x8] sm:$0xff]
    %v529 = vld [vmem:[%s5 + $0x10] sm:$0xff]
    %v530 = vld [vmem:[%s5 + $0x18] sm:$0xff]
    %v531 = vld [vmem:[#allocation5] sm:$0x3]
    %v533 = vlaneseq
    %v534 = vshrl.u32 %v533, 7
    %v535 = vsub.s32 0, %v534
    %v536 = vrot.slane %v531, %v535
    %v537 = vlaneseq
    %v538 = vshrl.u32 %v537, 7
    %v539 = vsub.s32 1, %v538
    %v540 = vrot.slane %v531, %v539
    %vm543 = vcmask 130048
    %v545 = vsel %vm543, %v526, 0
    %547 = vmatprep.subr.mxu0 0.0
    %548 = vmatpush1.msra.mxu0 0.0
    %549 = vmatprep.subr.mxu0 0.0
    %550 = vmatpush1.msra.mxu0 0.0
    %551 = vmatprep.subr.mxu0 0.0
    %552 = vmatpush1.msra.mxu0 0.0
    %553 = vmatprep.subr.mxu0 0.0
    %554 = vmatpush1.msra.mxu0 0.0
    %555 = vmatprep.subr.mxu0 0.0
    %556 = vmatpush1.msra.mxu0 0.0
    %557 = vmatprep.subr.mxu0 0.0
    %558 = vmatpush1.msra.mxu0 0.0
    %559 = vmatprep.subr.mxu0 0.0
    %560 = vmatpush1.msra.mxu0 0.0
    %561 = vmatprep.subr.mxu0 0.0
    %562 = vmatpush1.msra.mxu0 0.0
    %563 = vmatprep.subr.mxu0 0.0
    %564 = vmatpush1.msra.mxu0 0.0
    %565 = vmatprep.subr.mxu0 0.0
    %566 = vmatpush1.msra.mxu0 0.0
    %567 = vmatprep.subr.mxu0 0.0
    %568 = vmatpush1.msra.mxu0 0.0
    %569 = vmatprep.subr.mxu0 0.0
    %570 = vmatpush1.msra.mxu0 0.0
    %571 = vmatprep.subr.mxu0 0.0
    %572 = vmatpush1.msra.mxu0 0.0
    %573 = vmatprep.subr.mxu0 0.0
    %574 = vmatpush1.msra.mxu0 0.0
    %575 = vmatprep.subr.mxu0 %v530
    %576 = vmatpush1.msra.mxu0 %v529
    %577 = vmatprep.subr.mxu0 %v528
    %578 = vmatpush1.msra.mxu0 %v527
    %579 = vmatprep.subr.mxu0 0.0
    %580 = vmatpush2.msra.mxu0 0.0
    %581 = vmatprep.subr.mxu0 0.0
    %582 = vmatpush2.msra.mxu0 0.0
    %583 = vmatprep.subr.mxu0 0.0
    %584 = vmatpush2.msra.mxu0 0.0
    %585 = vmatprep.subr.mxu0 0.0
    %586 = vmatpush2.msra.mxu0 0.0
    %587 = vmatprep.subr.mxu0 0.0
    %588 = vmatpush2.msra.mxu0 0.0
    %589 = vmatprep.subr.mxu0 0.0
    %590 = vmatpush2.msra.mxu0 0.0
    %591 = vmatprep.subr.mxu0 0.0
    %592 = vmatpush2.msra.mxu0 0.0
    %593 = vmatprep.subr.mxu0 0.0
    %594 = vmatpush2.msra.mxu0 0.0
    %595 = vmatprep.subr.mxu0 0.0
    %596 = vmatpush2.msra.mxu0 0.0
    %597 = vmatprep.subr.mxu0 0.0
    %598 = vmatpush2.msra.mxu0 0.0
    %599 = vmatprep.subr.mxu0 0.0
    %600 = vmatpush2.msra.mxu0 0.0
    %601 = vmatprep.subr.mxu0 0.0
    %602 = vmatpush2.msra.mxu0 0.0
    %603 = vmatprep.subr.mxu0 0.0
    %604 = vmatpush2.msra.mxu0 0.0
    %605 = vmatprep.subr.mxu0 0.0
    %606 = vmatpush2.msra.mxu0 0.0
    %607 = vmatprep.subr.mxu0 0.0
    %608 = vmatpush2.msra.mxu0 0.0
    %609 = vmatprep.subr.mxu0 0.0
    %610 = vmatpush2.msra.mxu0 0.0
    %611 = vmatprep.mubr.f32.mxu0 0.0
    %612 = vmatmul.mubr.f32.gmra.mxu0 %v545
    %v613 = vpop.f32.mrf.mxu0
    %v614 = vadd.f32 %v536, %v613
    %v615 = vpop.f32.mrf.mxu0
    %v616 = vadd.f32 %v540, %v615
    %617 = vdwg.mxu0
    %v618 = vmul.f32 %v614, %v273
    %v619 = vmul.f32 %v616, %v414
    %v620 = vld [vmem:[%s7] sm:$0xff]
    %v621 = vld [vmem:[%s7 + $0x8] sm:$0xff]
    %v622 = vld [vmem:[%s7 + $0x10] sm:$0xff]
    %v623 = vld [vmem:[%s7 + $0x18] sm:$0xff]
    %v624 = vld [vmem:[%s7 + $0x20] sm:$0xff]
    %v625 = vld [vmem:[%s7 + $0x28] sm:$0xff]
    %v626 = vld [vmem:[%s7 + $0x30] sm:$0xff]
    %v627 = vld [vmem:[%s7 + $0x38] sm:$0xff]
    %v628 = vld [vmem:[%s7 + $0x40] sm:$0xff]
    %v629 = vld [vmem:[%s7 + $0x48] sm:$0xff]
    %v630 = vld [vmem:[%s7 + $0x50] sm:$0xff]
    %v631 = vld [vmem:[%s7 + $0x58] sm:$0xff]
    %v632 = vld [vmem:[%s7 + $0x60] sm:$0xff]
    %v633 = vld [vmem:[%s7 + $0x68] sm:$0xff]
    %v634 = vld [vmem:[%s7 + $0x70] sm:$0xff]
    %v635 = vld [vmem:[%s7 + $0x78] sm:$0xff]
    %v636 = vld [vmem:[%s7 + $0x80] sm:$0xff]
    %v637 = vld [vmem:[%s7 + $0x88] sm:$0xff]
    %v638 = vld [vmem:[%s7 + $0x90] sm:$0xff]
    %v639 = vld [vmem:[%s7 + $0x98] sm:$0xff]
    %v640 = vld [vmem:[%s7 + $0xa0] sm:$0xff]
    %v641 = vld [vmem:[%s7 + $0xa8] sm:$0xff]
    %v642 = vld [vmem:[%s7 + $0xb0] sm:$0xff]
    %v643 = vld [vmem:[%s7 + $0xb8] sm:$0xff]
    %v644 = vld [vmem:[%s7 + $0xc0] sm:$0xff]
    %v645 = vld [vmem:[%s7 + $0xc8] sm:$0xff]
    %v646 = vld [vmem:[%s7 + $0xd0] sm:$0xff]
    %v647 = vld [vmem:[%s7 + $0xd8] sm:$0xff]
    %v648 = vld [vmem:[%s7 + $0xe0] sm:$0xff]
    %v649 = vld [vmem:[%s7 + $0xe8] sm:$0xff]
    %v650 = vld [vmem:[%s7 + $0xf0] sm:$0xff]
    %v651 = vld [vmem:[%s7 + $0xf8] sm:$0xff]
    %v652 = vld [vmem:[%s8] sm:$0x1]
    %v654 = vlaneseq
    %v655 = vshrl.u32 %v654, 7
    %v656 = vsub.s32 0, %v655
    %v657 = vrot.slane %v652, %v656
    %659 = vmatprep.subr.mxu0 0.0
    %660 = vmatpush1.msra.mxu0 %v635
    %661 = vmatprep.subr.mxu0 0.0
    %662 = vmatpush1.msra.mxu0 %v634
    %663 = vmatprep.subr.mxu0 0.0
    %664 = vmatpush1.msra.mxu0 %v633
    %665 = vmatprep.subr.mxu0 0.0
    %666 = vmatpush1.msra.mxu0 %v632
    %667 = vmatprep.subr.mxu0 0.0
    %668 = vmatpush1.msra.mxu0 %v631
    %669 = vmatprep.subr.mxu0 0.0
    %670 = vmatpush1.msra.mxu0 %v630
    %671 = vmatprep.subr.mxu0 0.0
    %672 = vmatpush1.msra.mxu0 %v629
    %673 = vmatprep.subr.mxu0 0.0
    %674 = vmatpush1.msra.mxu0 %v628
    %675 = vmatprep.subr.mxu0 0.0
    %676 = vmatpush1.msra.mxu0 %v627
    %677 = vmatprep.subr.mxu0 0.0
    %678 = vmatpush1.msra.mxu0 %v626
    %679 = vmatprep.subr.mxu0 0.0
    %680 = vmatpush1.msra.mxu0 %v625
    %681 = vmatprep.subr.mxu0 0.0
    %682 = vmatpush1.msra.mxu0 %v624
    %683 = vmatprep.subr.mxu0 0.0
    %684 = vmatpush1.msra.mxu0 %v623
    %685 = vmatprep.subr.mxu0 0.0
    %686 = vmatpush1.msra.mxu0 %v622
    %687 = vmatprep.subr.mxu0 0.0
    %688 = vmatpush1.msra.mxu0 %v621
    %689 = vmatprep.subr.mxu0 0.0
    %690 = vmatpush1.msra.mxu0 %v620
    %691 = vmatprep.subr.mxu0 0.0
    %692 = vmatpush2.msra.mxu0 %v651
    %693 = vmatprep.subr.mxu0 0.0
    %694 = vmatpush2.msra.mxu0 %v650
    %695 = vmatprep.subr.mxu0 0.0
    %696 = vmatpush2.msra.mxu0 %v649
    %697 = vmatprep.subr.mxu0 0.0
    %698 = vmatpush2.msra.mxu0 %v648
    %699 = vmatprep.subr.mxu0 0.0
    %700 = vmatpush2.msra.mxu0 %v647
    %701 = vmatprep.subr.mxu0 0.0
    %702 = vmatpush2.msra.mxu0 %v646
    %703 = vmatprep.subr.mxu0 0.0
    %704 = vmatpush2.msra.mxu0 %v645
    %705 = vmatprep.subr.mxu0 0.0
    %706 = vmatpush2.msra.mxu0 %v644
    %707 = vmatprep.subr.mxu0 0.0
    %708 = vmatpush2.msra.mxu0 %v643
    %709 = vmatprep.subr.mxu0 0.0
    %710 = vmatpush2.msra.mxu0 %v642
    %711 = vmatprep.subr.mxu0 0.0
    %712 = vmatpush2.msra.mxu0 %v641
    %713 = vmatprep.subr.mxu0 0.0
    %714 = vmatpush2.msra.mxu0 %v640
    %715 = vmatprep.subr.mxu0 0.0
    %716 = vmatpush2.msra.mxu0 %v639
    %717 = vmatprep.subr.mxu0 0.0
    %718 = vmatpush2.msra.mxu0 %v638
    %719 = vmatprep.subr.mxu0 0.0
    %720 = vmatpush2.msra.mxu0 %v637
    %721 = vmatprep.subr.mxu0 0.0
    %722 = vmatpush2.msra.mxu0 %v636
    %723 = vmatprep.mubr.f32.mxu0 %v619
    %724 = vmatmul.mubr.f32.gmra.mxu0 %v618
    %v725 = vpop.f32.mrf.mxu0
    %v726 = vadd.f32 %v657, %v725
    %v727 = vpop.f32.mrf.mxu0
    %728 = vdwg.mxu0
    %729 = vst [vmem:[#allocation7] sm:$0xf] %v726
    // Predicated region
    $region46: #{tpu_custom_call.1} parent=1 // pred_check
      _
    $region47: #{tpu_custom_call.1} parent=1 // pred_check_branch
      %731 = sbr.rel (0) target = $region49
    $region48: #{tpu_custom_call.1} parent=1 // pred_region
      %s733 = ssub.s32 64, 64
      %734 = vsyncadd [#allocation4], %s733
      %s736 = sshll.u32 [#allocation7], 4
      %s737 = int_to_ptr.vmem [resolvable:$true] %s736
      %739 = dma.vmem_to_hbm [thread:$0]  %s737, 64, %s9, [#allocation4]
    $region49: #{tpu_custom_call.1} parent=1 // pred_fallthru
      _
    // Predicated region
    $region50: #{tpu_custom_call.1} parent=1 // pred_check
      _
    $region51: #{tpu_custom_call.1} parent=1 // pred_check_branch
      %741 = sbr.rel (0) target = $region53
    $region52: #{tpu_custom_call.1} parent=1 // pred_region
      %742 = dma.done [#allocation4], 64
    $region53: #{tpu_custom_call.1} parent=1 // pred_fallthru
      _
    %743 = vsyncpa [#allocation3], 1
    %744 = vsyncpa [#allocation6], 1
    %745 = vsyncpa [#allocation4], 1

</llo_original>
